<compile_context>
chip_gen: v5e
topology: v5e:2x2
jax: 0.10.0
libtpu: 0.0.40
codegen_flags: <defaults>
</compile_context>

<pallas_src>
import jax
import jax.numpy as jnp
from jax.experimental import pallas as pl
from jax.experimental.pallas import tpu as pltpu


def spd_power_kernel(u_ref, s_ref, w_ref, o_ref):
    # u_ref: (TB, N, N)  s_ref: (TB, 1, N)  w_ref: (1, 1, N)  o_ref: (TB, N, N)
    u = u_ref[...].astype(jnp.float32)
    s = s_ref[...].astype(jnp.float32)
    w = w_ref[...].astype(jnp.float32)

    # s_pow = s ** w, computed once per block in f32 on the EUP; clamp the
    # eigenvalues away from 0 so log never produces -inf / NaN (also handles
    # the zero-padded batch tail).
    tiny = jnp.float32(jnp.finfo(jnp.float32).tiny)
    s_pow = jnp.exp(w * jnp.log(jnp.maximum(s, tiny)))        # (TB, 1, N)

    # Scale column m of each U by s_pow[..., m] (lane-wise broadcast), then
    # reconstruct with one batched NT matmul:  out_b = (U_b * p_b) @ U_b^T.
    us = u * s_pow                                            # (TB, N, N)
    out = jnp.einsum("bik,bjk->bij", us, u,
                     preferred_element_type=jnp.float32)
    o_ref[...] = out.astype(o_ref.dtype)


def spd_power(x, weight, *, block_b=256):
    """x: (B, N, N) SPD matrices, weight: (N,). Returns (B, N, N)."""
    B, N, _ = x.shape
    out_dtype = x.dtype
    itemsize = jnp.dtype(out_dtype).itemsize

    # TODO(synk): the spectral decomposition itself has no Pallas equivalent;
    # it is computed in plain JAX glue.  eigh returns ASCENDING eigenvalues;
    # torch.svd pairs weight[i] with the i-th LARGEST singular value, so we
    # reverse the (tiny) weight vector instead of flipping the large u / s
    # arrays — the reconstruction is invariant to a consistent column
    # permutation, so this is exactly equivalent and saves a full HBM pass.
    s, u = jnp.linalg.eigh(x)
    w_paired = weight[::-1]                    # weight[N-1-k] pairs with s_asc[k]

    # Batch TB matrices per grid step; pad the batch to a multiple of TB.
    tb = max(1, min(block_b, B))
    n_blocks = pl.cdiv(B, tb)
    b_pad = n_blocks * tb
    if b_pad != B:
        u = jnp.pad(u, ((0, b_pad - B), (0, 0), (0, 0)))
        s = jnp.pad(s, ((0, b_pad - B), (0, 0)))   # zeros -> clamped in kernel

    u = u.astype(out_dtype)
    s3 = s.reshape(b_pad, 1, N).astype(out_dtype)
    w3 = w_paired.reshape(1, 1, N).astype(out_dtype)

    cost = pl.CostEstimate(
        flops=int(2 * b_pad * N**3 + 2 * b_pad * N * N),
        transcendentals=int(2 * b_pad * N),
        bytes_accessed=int((2 * b_pad * N * N + b_pad * N + N) * itemsize),
    )

    out = pl.pallas_call(
        spd_power_kernel,
        out_shape=jax.ShapeDtypeStruct((b_pad, N, N), out_dtype),
        grid_spec=pltpu.PrefetchScalarGridSpec(
            num_scalar_prefetch=0,
            grid=(n_blocks,),
            in_specs=[
                pl.BlockSpec((tb, N, N), lambda b: (b, 0, 0)),   # U (TB matrices)
                pl.BlockSpec((tb, 1, N), lambda b: (b, 0, 0)),   # eigenvalues
                pl.BlockSpec((1, 1, N), lambda b: (0, 0, 0)),    # weight (resident)
            ],
            out_specs=pl.BlockSpec((tb, N, N), lambda b: (b, 0, 0)),
        ),
        compiler_params=pltpu.CompilerParams(
            dimension_semantics=("parallel",),
            vmem_limit_bytes=32 * 1024 * 1024,
        ),
        cost_estimate=cost,
    )(u, s3, w3)

    return out[:B]


if __name__ == "__main__":
    B, N = 2, 16

    key = jax.random.PRNGKey(0)
    a = jax.random.normal(key, (B, N, N), dtype=jnp.float32)
    # Deterministic SPD inputs: A @ A.T + N * I  (positive definite).
    x = jnp.einsum("bij,bkj->bik", a, a) + N * jnp.eye(N, dtype=jnp.float32)

    # Module __init__ uses ones(input_dim); use a non-uniform deterministic
    # weight here so the (weight[i] <-> i-th largest eigenvalue) pairing is
    # actually exercised.
    weight = jnp.linspace(0.5, 1.5, N).astype(jnp.float32)

    out = jax.block_until_ready(spd_power(x, weight))
    assert out.shape == (B, N, N)
    assert bool(jnp.all(jnp.isfinite(out)))

    # Check 1: kernel math vs. plain-JAX einsum on an equivalent decomposition
    # (descending eigenvalues paired with weight, as in the torch forward).
    s_e, u_e = jnp.linalg.eigh(x)
    s_e = s_e[..., ::-1]
    u_e = u_e[..., ::-1]
    p_e = jnp.exp(weight[None, :] * jnp.log(s_e))
    ref_same = jnp.einsum("bik,bk,bjk->bij", u_e, p_e, u_e)
    assert jnp.allclose(out, ref_same, rtol=1e-4, atol=1e-3)

    # Check 2: original torch-forward semantics (SVD-based reconstruction).
    u_r, s_r, _ = jnp.linalg.svd(x)
    ref_orig = jnp.einsum("bik,bk,bjk->bij", u_r,
                          jnp.exp(weight[None, :] * jnp.log(s_r)), u_r)
    assert jnp.allclose(out, ref_orig, rtol=1e-3, atol=1e-2)

    print("KERNEL_OK")
</pallas_src>

<mosaic_0001>
module attributes {stable_mosaic.version = 11 : i64} {
  func.func @spd_power_kernel(%arg0: i32, %arg1: memref<2x16x16xf32, #tpu.memory_space<vmem>>, %arg2: memref<2x1x16xf32, #tpu.memory_space<vmem>>, %arg3: memref<1x1x16xf32, #tpu.memory_space<vmem>>, %arg4: memref<2x16x16xf32, #tpu.memory_space<vmem>>) attributes {dimension_semantics = [#tpu.dimension_semantics<parallel>], iteration_bounds = array<i64: 1>, scalar_prefetch = 0 : i64, scratch_operands = 0 : i64, tpu.core_type = #tpu.core_type<tc>, window_params = [{transform_indices = @transform_0, window_bounds = array<i64: 2, 16, 16>}, {transform_indices = @transform_1, window_bounds = array<i64: 2, 1, 16>}, {pipeline_mode = #tpu.pipeline_mode<synchronous>, transform_indices = @transform_2, window_bounds = array<i64: 1, 1, 16>}, {transform_indices = @transform_3, window_bounds = array<i64: 2, 16, 16>}]} {
    %c0 = arith.constant 0 : index
    %c0_0 = arith.constant 0 : index
    %c0_1 = arith.constant 0 : index
    %0 = vector.load %arg1[%c0, %c0_0, %c0_1] : memref<2x16x16xf32, #tpu.memory_space<vmem>>, vector<2x16x16xf32>
    %c0_2 = arith.constant 0 : index
    %c0_3 = arith.constant 0 : index
    %c0_4 = arith.constant 0 : index
    %1 = vector.load %arg2[%c0_2, %c0_3, %c0_4] : memref<2x1x16xf32, #tpu.memory_space<vmem>>, vector<2x1x16xf32>
    %c0_5 = arith.constant 0 : index
    %c0_6 = arith.constant 0 : index
    %c0_7 = arith.constant 0 : index
    %2 = vector.load %arg3[%c0_5, %c0_6, %c0_7] : memref<1x1x16xf32, #tpu.memory_space<vmem>>, vector<1x1x16xf32>
    %cst = arith.constant 1.17549435E-38 : f32
    %3 = vector.broadcast %cst : f32 to vector<2x1x16xf32>
    %4 = arith.maximumf %1, %3 : vector<2x1x16xf32>
    %5 = math.log %4 : vector<2x1x16xf32>
    %6 = vector.broadcast %2 : vector<1x1x16xf32> to vector<2x1x16xf32>
    %7 = arith.mulf %6, %5 : vector<2x1x16xf32>
    %8 = math.exp %7 : vector<2x1x16xf32>
    %9 = vector.broadcast %8 : vector<2x1x16xf32> to vector<2x16x16xf32>
    %10 = arith.mulf %0, %9 : vector<2x16x16xf32>
    "tpu.trace_start"() <{level = 10 : i32, message = "bik,bjk->bij"}> : () -> ()
    %cst_8 = arith.constant dense<0.000000e+00> : vector<2x16x16xf32>
    %11 = tpu.matmul %10, %0, %cst_8 {dimension_numbers = #tpu.dot_dimension_numbers<[2], [2], [1], [1], [0, 0, 0, 1, 1, 1], [0], [0]>} : vector<2x16x16xf32>, vector<2x16x16xf32>, vector<2x16x16xf32> -> vector<2x16x16xf32>
    "tpu.trace_stop"() : () -> ()
    %c0_9 = arith.constant 0 : index
    %c0_10 = arith.constant 0 : index
    %c0_11 = arith.constant 0 : index
    %12 = vector.load %arg4[%c0_9, %c0_10, %c0_11] : memref<2x16x16xf32, #tpu.memory_space<vmem>>, vector<2x16x16xf32>
    tpu.vector_store %arg4[%c0_9, %c0_10, %c0_11], %11 {strides = array<i32>} : memref<2x16x16xf32, #tpu.memory_space<vmem>>, vector<2x16x16xf32>,
    return
  }
  func.func @transform_0(%arg0: i32) -> (i32, i32, i32) {
    %c0_i32 = arith.constant 0 : i32
    %c0_i32_0 = arith.constant 0 : i32
    %c0_i32_1 = arith.constant 0 : i32
    return %arg0, %c0_i32, %c0_i32_0 : i32, i32, i32
  }
  func.func @transform_1(%arg0: i32) -> (i32, i32, i32) {
    %c0_i32 = arith.constant 0 : i32
    %c0_i32_0 = arith.constant 0 : i32
    %c0_i32_1 = arith.constant 0 : i32
    return %arg0, %c0_i32, %c0_i32_0 : i32, i32, i32
  }
  func.func @transform_2(%arg0: i32) -> (i32, i32, i32) {
    %c0_i32 = arith.constant 0 : i32
    %c0_i32_0 = arith.constant 0 : i32
    %c0_i32_1 = arith.constant 0 : i32
    %c0_i32_2 = arith.constant 0 : i32
    return %c0_i32, %c0_i32_0, %c0_i32_1 : i32, i32, i32
  }
  func.func @transform_3(%arg0: i32) -> (i32, i32, i32) {
    %c0_i32 = arith.constant 0 : i32
    %c0_i32_0 = arith.constant 0 : i32
    %c0_i32_1 = arith.constant 0 : i32
    return %arg0, %c0_i32, %c0_i32_0 : i32, i32, i32
  }
}

</mosaic_0001>

<llo_original>
// kernel: tpu_custom_call.1
$region0: #{tpu_custom_call.1}
  #allocation0 [shape = 'u32[]', space=smem, size = 0x4, offset = 0x4, fixed_abs, tag = 'smem constant byte address 0x4 - core index']
  #allocation1 [shape = 'u32[72,128]{1,0:T(1,128)}', space=vmem, size = 0x9000, scoped, tag = 'internal scratch']
  %s0 = inlined_call_operand.hbm [shape: f32[2,16,16], index: 0, kind: input, shape index: {}]
  %s1 = inlined_call_operand.hbm [shape: f32[2,1,16], index: 1, kind: input, shape index: {}]
  %s2 = inlined_call_operand.vmem [shape: f32[1,1,16], index: 2, kind: input, shape index: {}]
  %s3 = inlined_call_operand.hbm [shape: f32[2,16,16], index: 3, kind: output, shape index: {}]
  %s4 = sld [smem:[#allocation0]]
  $region30: #{tpu_custom_call.1} parent=0
    _
  %s6 = ssub.s32 1, %s4
  %s7 = scalar_select 0, %s6, %s4
  $region1: #{tpu_custom_call.1} parent=0
    #allocation2 [shape = 'u8[16384]{0}', space=vmem, size = 0x4000, scoped, tag = 'input window, operand 0, single buffered']
    #allocation3 [shape = 's32[1]{0}', space=sflag, size = 0x4, scoped, tag = 'scoped memory for tpu_custom_call.1']
    #allocation4 [shape = 's32[1]{0}', space=sflag, size = 0x4, scoped, tag = 'scoped memory for tpu_custom_call.1']
    #allocation5 [shape = 'u8[1024]{0}', space=vmem, size = 0x400, scoped, tag = 'input window, operand 1, single buffered']
    #allocation6 [shape = 's32[1]{0}', space=sflag, size = 0x4, scoped, tag = 'scoped memory for tpu_custom_call.1']
    #allocation7 [shape = 'u8[16384]{0}', space=vmem, size = 0x4000, scoped, tag = 'output window, operand 0, single buffered']
    %8 = vsyncpa [#allocation3], 0
    %9 = vsyncpa [#allocation6], 0
    %10 = vsyncpa [#allocation4], 0
    // Predicated region
    $region2: #{tpu_custom_call.1} parent=1 // pred_check
      _
    $region3: #{tpu_custom_call.1} parent=1 // pred_check_branch
      %12 = sbr.rel (0) target = $region5
    $region4: #{tpu_custom_call.1} parent=1 // pred_region
      %14 = vsyncadd [#allocation3], 0
      %s15 = sshll.u32 %s0, 4
      %s16 = int_to_ptr.hbm [resolvable:$true] %s15
      %s17 = sshll.u32 [#allocation2], 4
      %s18 = int_to_ptr.vmem [resolvable:$true] %s17
      %23 = dma.hbm_to_vmem [thread:$0]  %s16, 512, %s18, [#allocation3], 128, 128, 8
    $region5: #{tpu_custom_call.1} parent=1 // pred_fallthru
      _
    // Predicated region
    $region6: #{tpu_custom_call.1} parent=1 // pred_check
      _
    $region7: #{tpu_custom_call.1} parent=1 // pred_check_branch
      %25 = sbr.rel (0) target = $region9
    $region8: #{tpu_custom_call.1} parent=1 // pred_region
      %27 = vsyncadd [#allocation6], 0
      %s28 = sshll.u32 %s1, 4
      %s29 = int_to_ptr.hbm [resolvable:$true] %s28
      %s30 = sshll.u32 [#allocation5], 4
      %s31 = int_to_ptr.vmem [resolvable:$true] %s30
      %36 = dma.hbm_to_vmem [thread:$0]  %s29, 32, %s31, [#allocation6], 16, 16, 1
    $region9: #{tpu_custom_call.1} parent=1 // pred_fallthru
      _
    // Predicated region
    $region10: #{tpu_custom_call.1} parent=1 // pred_check
      _
    $region11: #{tpu_custom_call.1} parent=1 // pred_check_branch
      %38 = sbr.rel (0) target = $region13
    $region12: #{tpu_custom_call.1} parent=1 // pred_region
      _
    $region13: #{tpu_custom_call.1} parent=1 // pred_fallthru
      _
    // Predicated region
    $region14: #{tpu_custom_call.1} parent=1 // pred_check
      _
    $region15: #{tpu_custom_call.1} parent=1 // pred_check_branch
      %40 = sbr.rel (0) target = $region17
    $region16: #{tpu_custom_call.1} parent=1 // pred_region
      %42 = dma.done [#allocation3], 512
    $region17: #{tpu_custom_call.1} parent=1 // pred_fallthru
      _
    // Predicated region
    $region18: #{tpu_custom_call.1} parent=1 // pred_check
      _
    $region19: #{tpu_custom_call.1} parent=1 // pred_check_branch
      %44 = sbr.rel (0) target = $region21
    $region20: #{tpu_custom_call.1} parent=1 // pred_region
      %46 = dma.done [#allocation6], 32
    $region21: #{tpu_custom_call.1} parent=1 // pred_fallthru
      _
    %v47 = vld [vmem:[#allocation2] sm:$0xff]
    %v48 = vld [vmem:[#allocation2 + $0x8] sm:$0xff]
    %v49 = vld [vmem:[#allocation2 + $0x10] sm:$0xff]
    %v50 = vld [vmem:[#allocation2 + $0x18] sm:$0xff]
    %v51 = vld [vmem:[#allocation5] sm:$0x1]
    %v52 = vld [vmem:[#allocation5 + $0x1] sm:$0x1]
    %v53 = vld [vmem:[%s2] sm:$0x1]
    %v54 = vmax.f32 %v51, 1.1754944e-38
    %v55 = vmax.f32 %v52, 1.1754944e-38
    %v56 = vlog2.pop %v54
    %v57 = vmul.f32 %v56, 0.6931472
    %v58 = vlog2.pop %v55
    %v59 = vmul.f32 %v58, 0.6931472
    %v60 = vmul.f32 %v53, %v57
    %v61 = vmul.f32 %v53, %v59
    %v62 = vmul.f32 %v60, 1.442695
    %v63 = vpow.pop %v62
    %v64 = vmul.f32 %v61, 1.442695
    %v65 = vpow.pop %v64
    %v68 = vperm.slane %v63, 0
    %v69 = vperm.slane %v65, 0
    %v72 = vmul.f32 %v47, %v68
    %v73 = vmul.f32 %v48, %v68
    %v74 = vmul.f32 %v49, %v69
    %v75 = vmul.f32 %v50, %v69
    %vm76 = vcmask 130048
    %v78 = vsel %vm76, %v72, 0
    %v81 = vsel %vm76, %v73, 0
    %v84 = vsel %vm76, %v47, 0
    %v87 = vsel %vm76, %v48, 0
    %89 = vmatpush.xpose.msra.mxu0 0.0
    %90 = vmatpush.xpose.msra.mxu0 0.0
    %91 = vmatpush.xpose.msra.mxu0 0.0
    %92 = vmatpush.xpose.msra.mxu0 0.0
    %93 = vmatpush.xpose.msra.mxu0 0.0
    %94 = vmatpush.xpose.msra.mxu0 0.0
    %95 = vmatpush.xpose.msra.mxu0 0.0
    %96 = vmatpush.xpose.msra.mxu0 0.0
    %97 = vmatpush.xpose.msra.mxu0 0.0
    %98 = vmatpush.xpose.msra.mxu0 0.0
    %99 = vmatpush.xpose.msra.mxu0 0.0
    %100 = vmatpush.xpose.msra.mxu0 0.0
    %101 = vmatpush.xpose.msra.mxu0 0.0
    %102 = vmatpush.xpose.msra.mxu0 0.0
    %103 = vmatpush.xpose.msra.mxu0 %v87
    %104 = vmatpush.xpose.msra.mxu0 %v84
    %105 = vmatmul.f32.gmra.mxu0 %v78
    %v106 = vpop.f32.mrf.mxu0
    %v107 = vadd.f32 0.0, %v106
    %108 = vmatmul.f32.gmra.mxu0 %v81
    %v109 = vpop.f32.mrf.mxu0
    %v110 = vadd.f32 0.0, %v109
    %111 = vdwg.mxu0
    %v113 = vsel %vm76, %v74, 0
    %v116 = vsel %vm76, %v75, 0
    %v119 = vsel %vm76, %v49, 0
    %v122 = vsel %vm76, %v50, 0
    %124 = vmatpush.xpose.msra.mxu0 0.0
    %125 = vmatpush.xpose.msra.mxu0 0.0
    %126 = vmatpush.xpose.msra.mxu0 0.0
    %127 = vmatpush.xpose.msra.mxu0 0.0
    %128 = vmatpush.xpose.msra.mxu0 0.0
    %129 = vmatpush.xpose.msra.mxu0 0.0
    %130 = vmatpush.xpose.msra.mxu0 0.0
    %131 = vmatpush.xpose.msra.mxu0 0.0
    %132 = vmatpush.xpose.msra.mxu0 0.0
    %133 = vmatpush.xpose.msra.mxu0 0.0
    %134 = vmatpush.xpose.msra.mxu0 0.0
    %135 = vmatpush.xpose.msra.mxu0 0.0
    %136 = vmatpush.xpose.msra.mxu0 0.0
    %137 = vmatpush.xpose.msra.mxu0 0.0
    %138 = vmatpush.xpose.msra.mxu0 %v122
    %139 = vmatpush.xpose.msra.mxu0 %v119
    %140 = vmatmul.f32.gmra.mxu0 %v113
    %v141 = vpop.f32.mrf.mxu0
    %v142 = vadd.f32 0.0, %v141
    %143 = vmatmul.f32.gmra.mxu0 %v116
    %v144 = vpop.f32.mrf.mxu0
    %v145 = vadd.f32 0.0, %v144
    %146 = vdwg.mxu0
    %147 = vst.msk [vmem:[#allocation7] sm:$0xff] %vm76, %v107
    %148 = vst.msk [vmem:[#allocation7 + $0x8] sm:$0xff] %vm76, %v110
    %149 = vst.msk [vmem:[#allocation7 + $0x10] sm:$0xff] %vm76, %v142
    %150 = vst.msk [vmem:[#allocation7 + $0x18] sm:$0xff] %vm76, %v145
    // Predicated region
    $region22: #{tpu_custom_call.1} parent=1 // pred_check
      _
    $region23: #{tpu_custom_call.1} parent=1 // pred_check_branch
      %152 = sbr.rel (0) target = $region25
    $region24: #{tpu_custom_call.1} parent=1 // pred_region
      %154 = vsyncadd [#allocation4], 0
      %s155 = sshll.u32 [#allocation7], 4
      %s156 = int_to_ptr.vmem [resolvable:$true] %s155
      %s157 = sshll.u32 %s3, 4
      %s158 = int_to_ptr.hbm [resolvable:$true] %s157
      %163 = dma.vmem_to_hbm [thread:$0]  %s156, 512, %s158, [#allocation4], 128, 128, 8
    $region25: #{tpu_custom_call.1} parent=1 // pred_fallthru
      _
    // Predicated region
    $region26: #{tpu_custom_call.1} parent=1 // pred_check
      _
    $region27: #{tpu_custom_call.1} parent=1 // pred_check_branch
      %165 = sbr.rel (0) target = $region29
    $region28: #{tpu_custom_call.1} parent=1 // pred_region
      %167 = dma.done [#allocation4], 512
    $region29: #{tpu_custom_call.1} parent=1 // pred_fallthru
      _
    %168 = vsyncpa [#allocation3], 1
    %169 = vsyncpa [#allocation6], 1
    %170 = vsyncpa [#allocation4], 1

</llo_original>
